<compile_context>
chip_gen: v5e
topology: v5e:2x2
jax: 0.10.0
libtpu: 0.0.40
codegen_flags: <defaults>
</compile_context>

<pallas_src>
import functools

import jax
import jax.numpy as jnp
from jax.experimental import pallas as pl
from jax.experimental.pallas import tpu as pltpu


def _basic_block_kernel(x_ref, w1_ref, w2_ref, s1_ref, b1_ref, s2_ref, b2_ref,
                        out_ref, col_ref, *, C, H, W):
    """Fused BasicBlock forward for one batch sample.

    x_ref   : (1, C, H*W)  f32   input sample (channel-major, spatial flattened)
    w*_ref  : (C, 9*C)     bf16  conv weight, [co, (dy*3+dx)*C + ci]
    s*/b*   : (C, 1)       f32   folded BatchNorm scale / bias
    out_ref : (1, C, H*W)  f32
    col_ref : (9*C, H*W)   bf16  scratch im2col matrix (reused by both convs)
    """
    HW = H * W
    lane = jax.lax.broadcasted_iota(jnp.int32, (1, HW), 1)   # flattened pos
    xcol = lane % W                                          # column within row

    def build_col(v):
        # v: (C, HW) f32.  For each of the 9 taps, produce the spatially
        # shifted view (zero outside the image) and store it as bf16 into the
        # im2col scratch.  Shifts are static lane slices + concat; boundary
        # handling is a lane mask (no padded tensor is ever materialized).
        for dy in range(3):
            for dx in range(3):
                off = (dy - 1) * W + (dx - 1)
                if off > 0:
                    sv = jnp.concatenate(
                        [v[:, off:], jnp.zeros((C, off), v.dtype)], axis=1)
                elif off < 0:
                    sv = jnp.concatenate(
                        [jnp.zeros((C, -off), v.dtype), v[:, :off]], axis=1)
                else:
                    sv = v
                mask = None
                if dx == 0:
                    mask = xcol >= 1
                elif dx == 2:
                    mask = xcol < (W - 1)
                if dy == 0:
                    m2 = lane >= W
                    mask = m2 if mask is None else jnp.logical_and(mask, m2)
                elif dy == 2:
                    m2 = lane < (HW - W)
                    mask = m2 if mask is None else jnp.logical_and(mask, m2)
                if mask is not None:
                    sv = jnp.where(mask, sv, 0.0)
                tap = dy * 3 + dx
                col_ref[tap * C:(tap + 1) * C, :] = sv.astype(col_ref.dtype)

    x = x_ref[0]                                   # (C, HW) f32, also residual

    # ---- conv1 + bn1 + relu : single K=9*C matmul, bf16 in / f32 accumulate
    build_col(x)
    acc = jnp.dot(w1_ref[...], col_ref[...], preferred_element_type=jnp.float32)
    h = jnp.maximum(acc * s1_ref[...] + b1_ref[...], 0.0)

    # ---- conv2 + bn2 + residual + relu
    build_col(h)
    acc = jnp.dot(w2_ref[...], col_ref[...], preferred_element_type=jnp.float32)
    out = acc * s2_ref[...] + b2_ref[...] + x
    out_ref[0] = jnp.maximum(out, 0.0).astype(out_ref.dtype)


def _fold_bn(gamma, beta, running_mean, running_var, eps=1e-5):
    scale = gamma / jnp.sqrt(running_var + eps)
    bias = beta - running_mean * scale
    return (scale.reshape(-1, 1).astype(jnp.float32),
            bias.reshape(-1, 1).astype(jnp.float32))


def _conv_weight_to_matmul(w):
    # PyTorch (Cout, Cin, 3, 3) -> (Cout, 9*Cin) with K ordered (dy, dx, ci),
    # matching build_col's row order tap*Cin + ci.  Tiny one-time parameter op.
    cout, cin, kh, kw = w.shape
    return jnp.transpose(w, (0, 2, 3, 1)).reshape(
        cout, kh * kw * cin).astype(jnp.bfloat16)


def basic_block_forward(x_nchw, params):
    """BasicBlock.forward (eval-mode BN, stride=1, downsample=None), NCHW I/O."""
    N, C, H, W = x_nchw.shape
    HW = H * W
    assert params["w1"].shape[0] == params["w1"].shape[1] == C, \
        "stride=1 / downsample=None BasicBlock requires inplanes == planes"

    w1 = _conv_weight_to_matmul(params["w1"])
    w2 = _conv_weight_to_matmul(params["w2"])
    s1, b1 = _fold_bn(*params["bn1"])
    s2, b2 = _fold_bn(*params["bn2"])

    # Free, contiguous reshape (no transpose, no HBM pass): (N,C,H,W)->(N,C,HW).
    x2 = x_nchw.reshape(N, C, HW)

    kernel = functools.partial(_basic_block_kernel, C=C, H=H, W=W)
    out = pl.pallas_call(
        kernel,
        out_shape=jax.ShapeDtypeStruct((N, C, HW), jnp.float32),
        grid=(N,),
        in_specs=[
            pl.BlockSpec((1, C, HW), lambda n: (n, 0, 0)),    # x (per sample)
            pl.BlockSpec((C, 9 * C), lambda n: (0, 0)),        # w1 (resident)
            pl.BlockSpec((C, 9 * C), lambda n: (0, 0)),        # w2 (resident)
            pl.BlockSpec((C, 1), lambda n: (0, 0)),            # bn1 scale
            pl.BlockSpec((C, 1), lambda n: (0, 0)),            # bn1 bias
            pl.BlockSpec((C, 1), lambda n: (0, 0)),            # bn2 scale
            pl.BlockSpec((C, 1), lambda n: (0, 0)),            # bn2 bias
        ],
        out_specs=pl.BlockSpec((1, C, HW), lambda n: (n, 0, 0)),
        scratch_shapes=[pltpu.VMEM((9 * C, HW), jnp.bfloat16)],   # im2col
        compiler_params=pltpu.CompilerParams(
            dimension_semantics=("parallel",),
            vmem_limit_bytes=64 * 1024 * 1024),
    )(x2, w1, w2, s1, b1, s2, b2)

    return out.reshape(N, C, H, W)


def _reference_basic_block(x, params):
    """Pure-JAX f32 reference of the PyTorch BasicBlock (eval mode)."""
    def conv(y, w):
        return jax.lax.conv_general_dilated(
            y, w, window_strides=(1, 1), padding=((1, 1), (1, 1)),
            dimension_numbers=("NCHW", "OIHW", "NCHW"),
            precision=jax.lax.Precision.HIGHEST)

    def bn(y, p):
        g, b, m, v = p
        s = g / jnp.sqrt(v + 1e-5)
        return y * s[None, :, None, None] + (b - m * s)[None, :, None, None]

    h = jax.nn.relu(bn(conv(x, params["w1"]), params["bn1"]))
    o = bn(conv(h, params["w2"]), params["bn2"]) + x
    return jax.nn.relu(o)


if __name__ == "__main__":
    key = jax.random.PRNGKey(0)
    keys = jax.random.split(key, 9)

    N, C, H, W = 2, 4, 16, 16   # inplanes = planes = 4, stride = 1

    x = jax.random.normal(keys[0], (N, C, H, W), jnp.float32)

    # PyTorch-layout conv weights (Cout, Cin, 3, 3), bias=False.
    w1 = 0.1 * jax.random.normal(keys[1], (C, C, 3, 3), jnp.float32)
    w2 = 0.1 * jax.random.normal(keys[2], (C, C, 3, 3), jnp.float32)

    bn1 = (
        1.0 + 0.1 * jax.random.normal(keys[3], (C,), jnp.float32),          # gamma
        0.1 * jax.random.normal(keys[4], (C,), jnp.float32),                # beta
        0.05 * jax.random.normal(keys[5], (C,), jnp.float32),               # running_mean
        1.0 + 0.1 * jnp.abs(jax.random.normal(keys[6], (C,), jnp.float32)), # running_var
    )
    bn2 = (
        1.0 + 0.1 * jax.random.normal(keys[7], (C,), jnp.float32),
        0.1 * jax.random.normal(keys[8], (C,), jnp.float32),
        jnp.zeros((C,), jnp.float32),
        jnp.ones((C,), jnp.float32),
    )

    params = {"w1": w1, "w2": w2, "bn1": bn1, "bn2": bn2}

    out = basic_block_forward(x, params)
    jax.block_until_ready(out)
    assert out.shape == (N, C, H, W)

    ref = _reference_basic_block(x, params)
    err = float(jnp.max(jnp.abs(out - ref)))
    assert err < 5e-2, f"max abs error vs reference: {err}"
    print("KERNEL_OK")
</pallas_src>

<mosaic_0001>
module attributes {stable_mosaic.version = 11 : i64} {
  func.func @_basic_block_kernel(%arg0: i32, %arg1: memref<1x4x256xf32, #tpu.memory_space<vmem>>, %arg2: memref<4x36xbf16, #tpu.memory_space<vmem>>, %arg3: memref<4x36xbf16, #tpu.memory_space<vmem>>, %arg4: memref<4x1xf32, #tpu.memory_space<vmem>>, %arg5: memref<4x1xf32, #tpu.memory_space<vmem>>, %arg6: memref<4x1xf32, #tpu.memory_space<vmem>>, %arg7: memref<4x1xf32, #tpu.memory_space<vmem>>, %arg8: memref<1x4x256xf32, #tpu.memory_space<vmem>>, %arg9: memref<36x256xbf16, #tpu.memory_space<vmem>>) attributes {dimension_semantics = [#tpu.dimension_semantics<parallel>], iteration_bounds = array<i64: 2>, scalar_prefetch = 0 : i64, scratch_operands = 1 : i64, tpu.core_type = #tpu.core_type<tc>, window_params = [{transform_indices = @transform_0, window_bounds = array<i64: 1, 4, 256>}, {pipeline_mode = #tpu.pipeline_mode<synchronous>, transform_indices = @transform_1, window_bounds = array<i64: 4, 36>}, {pipeline_mode = #tpu.pipeline_mode<synchronous>, transform_indices = @transform_2, window_bounds = array<i64: 4, 36>}, {pipeline_mode = #tpu.pipeline_mode<synchronous>, transform_indices = @transform_3, window_bounds = array<i64: 4, 1>}, {pipeline_mode = #tpu.pipeline_mode<synchronous>, transform_indices = @transform_4, window_bounds = array<i64: 4, 1>}, {pipeline_mode = #tpu.pipeline_mode<synchronous>, transform_indices = @transform_5, window_bounds = array<i64: 4, 1>}, {pipeline_mode = #tpu.pipeline_mode<synchronous>, transform_indices = @transform_6, window_bounds = array<i64: 4, 1>}, {transform_indices = @transform_7, window_bounds = array<i64: 1, 4, 256>}]} {
    %0 = tpu.iota {dimensions = array<i32: 1>} : vector<1x256xi32>
    %c16_i32 = arith.constant 16 : i32
    %c0_i32 = arith.constant 0 : i32
    %1 = arith.cmpi eq, %c16_i32, %c0_i32 : i32
    %c1_i32 = arith.constant 1 : i32
    %2 = arith.select %1, %c1_i32, %c16_i32 : i32
    %3 = vector.broadcast %2 : i32 to vector<1x256xi32>
    %4 = arith.remsi %0, %3 : vector<1x256xi32>
    %c0_i32_0 = arith.constant 0 : i32
    %5 = vector.broadcast %c0_i32_0 : i32 to vector<1x256xi32>
    %6 = arith.cmpi ne, %4, %5 : vector<1x256xi32>
    %c0_i32_1 = arith.constant 0 : i32
    %7 = vector.broadcast %c0_i32_1 : i32 to vector<1x256xi32>
    %8 = arith.cmpi slt, %4, %7 : vector<1x256xi32>
    %c0_i32_2 = arith.constant 0 : i32
    %9 = arith.cmpi slt, %2, %c0_i32_2 : i32
    %10 = vector.broadcast %9 : i1 to vector<1x256xi1>
    %11 = vector.broadcast %10 : vector<1x256xi1> to vector<1x256xi1>
    %12 = arith.xori %8, %11 : vector<1x256xi1>
    %13 = arith.andi %12, %6 : vector<1x256xi1>
    %14 = vector.broadcast %2 : i32 to vector<1x256xi32>
    %15 = arith.addi %4, %14 : vector<1x256xi32>
    %16 = arith.select %13, %15, %4 : vector<1x256xi1>, vector<1x256xi32>
    %c0 = arith.constant 0 : index
    %c0_3 = arith.constant 0 : index
    %c0_4 = arith.constant 0 : index
    %17 = vector.load %arg1[%c0, %c0_3, %c0_4] : memref<1x4x256xf32, #tpu.memory_space<vmem>>, vector<1x4x256xf32>
    %18 = vector.shape_cast %17 : vector<1x4x256xf32> to vector<4x256xf32>
    %cst = arith.constant 0.000000e+00 : f32
    %19 = vector.broadcast %cst : f32 to vector<4x17xf32>
    %20 = vector.extract_strided_slice %18 {offsets = [0, 0], sizes = [4, 239], strides = [1, 1]} : vector<4x256xf32> to vector<4x239xf32>
    %21 = tpu.concatenate %19, %20 in 1 : vector<4x17xf32>, vector<4x239xf32> -> vector<4x256xf32>
    %c1_i32_5 = arith.constant 1 : i32
    %22 = vector.broadcast %c1_i32_5 : i32 to vector<1x256xi32>
    %23 = arith.cmpi sge, %16, %22 : vector<1x256xi32>
    %c16_i32_6 = arith.constant 16 : i32
    %24 = vector.broadcast %c16_i32_6 : i32 to vector<1x256xi32>
    %25 = arith.cmpi sge, %0, %24 : vector<1x256xi32>
    %26 = arith.andi %23, %25 : vector<1x256xi1>
    %cst_7 = arith.constant 0.000000e+00 : f32
    %27 = vector.shape_cast %26 : vector<1x256xi1> to vector<1x256xi1>
    %28 = vector.broadcast %27 : vector<1x256xi1> to vector<4x256xi1>
    %29 = vector.broadcast %cst_7 : f32 to vector<4x256xf32>
    %30 = arith.select %28, %21, %29 : vector<4x256xi1>, vector<4x256xf32>
    %31 = arith.truncf %30 : vector<4x256xf32> to vector<4x256xbf16>
    %c0_8 = arith.constant 0 : index
    %c0_9 = arith.constant 0 : index
    %32 = vector.load %arg9[%c0_8, %c0_9] : memref<36x256xbf16, #tpu.memory_space<vmem>>, vector<4x256xbf16>
    tpu.vector_store %arg9[%c0_8, %c0_9], %31 {strides = array<i32>} : memref<36x256xbf16, #tpu.memory_space<vmem>>, vector<4x256xbf16>,
    %cst_10 = arith.constant 0.000000e+00 : f32
    %33 = vector.broadcast %cst_10 : f32 to vector<4x16xf32>
    %34 = vector.extract_strided_slice %18 {offsets = [0, 0], sizes = [4, 240], strides = [1, 1]} : vector<4x256xf32> to vector<4x240xf32>
    %35 = tpu.concatenate %33, %34 in 1 : vector<4x16xf32>, vector<4x240xf32> -> vector<4x256xf32>
    %c16_i32_11 = arith.constant 16 : i32
    %36 = vector.broadcast %c16_i32_11 : i32 to vector<1x256xi32>
    %37 = arith.cmpi sge, %0, %36 : vector<1x256xi32>
    %cst_12 = arith.constant 0.000000e+00 : f32
    %38 = vector.shape_cast %37 : vector<1x256xi1> to vector<1x256xi1>
    %39 = vector.broadcast %38 : vector<1x256xi1> to vector<4x256xi1>
    %40 = vector.broadcast %cst_12 : f32 to vector<4x256xf32>
    %41 = arith.select %39, %35, %40 : vector<4x256xi1>, vector<4x256xf32>
    %42 = arith.truncf %41 : vector<4x256xf32> to vector<4x256xbf16>
    %c4 = arith.constant 4 : index
    %c0_13 = arith.constant 0 : index
    %43 = vector.load %arg9[%c4, %c0_13] : memref<36x256xbf16, #tpu.memory_space<vmem>>, vector<4x256xbf16>
    tpu.vector_store %arg9[%c4, %c0_13], %42 {strides = array<i32>} : memref<36x256xbf16, #tpu.memory_space<vmem>>, vector<4x256xbf16>,
    %cst_14 = arith.constant 0.000000e+00 : f32
    %44 = vector.broadcast %cst_14 : f32 to vector<4x15xf32>
    %45 = vector.extract_strided_slice %18 {offsets = [0, 0], sizes = [4, 241], strides = [1, 1]} : vector<4x256xf32> to vector<4x241xf32>
    %46 = tpu.concatenate %44, %45 in 1 : vector<4x15xf32>, vector<4x241xf32> -> vector<4x256xf32>
    %c15_i32 = arith.constant 15 : i32
    %47 = vector.broadcast %c15_i32 : i32 to vector<1x256xi32>
    %48 = arith.cmpi slt, %16, %47 : vector<1x256xi32>
    %c16_i32_15 = arith.constant 16 : i32
    %49 = vector.broadcast %c16_i32_15 : i32 to vector<1x256xi32>
    %50 = arith.cmpi sge, %0, %49 : vector<1x256xi32>
    %51 = arith.andi %48, %50 : vector<1x256xi1>
    %cst_16 = arith.constant 0.000000e+00 : f32
    %52 = vector.shape_cast %51 : vector<1x256xi1> to vector<1x256xi1>
    %53 = vector.broadcast %52 : vector<1x256xi1> to vector<4x256xi1>
    %54 = vector.broadcast %cst_16 : f32 to vector<4x256xf32>
    %55 = arith.select %53, %46, %54 : vector<4x256xi1>, vector<4x256xf32>
    %56 = arith.truncf %55 : vector<4x256xf32> to vector<4x256xbf16>
    %c8 = arith.constant 8 : index
    %c0_17 = arith.constant 0 : index
    %57 = vector.load %arg9[%c8, %c0_17] : memref<36x256xbf16, #tpu.memory_space<vmem>>, vector<4x256xbf16>
    tpu.vector_store %arg9[%c8, %c0_17], %56 {strides = array<i32>} : memref<36x256xbf16, #tpu.memory_space<vmem>>, vector<4x256xbf16>,
    %cst_18 = arith.constant 0.000000e+00 : f32
    %58 = vector.broadcast %cst_18 : f32 to vector<4x1xf32>
    %59 = vector.extract_strided_slice %18 {offsets = [0, 0], sizes = [4, 255], strides = [1, 1]} : vector<4x256xf32> to vector<4x255xf32>
    %60 = tpu.concatenate %58, %59 in 1 : vector<4x1xf32>, vector<4x255xf32> -> vector<4x256xf32>
    %c1_i32_19 = arith.constant 1 : i32
    %61 = vector.broadcast %c1_i32_19 : i32 to vector<1x256xi32>
    %62 = arith.cmpi sge, %16, %61 : vector<1x256xi32>
    %cst_20 = arith.constant 0.000000e+00 : f32
    %63 = vector.shape_cast %62 : vector<1x256xi1> to vector<1x256xi1>
    %64 = vector.broadcast %63 : vector<1x256xi1> to vector<4x256xi1>
    %65 = vector.broadcast %cst_20 : f32 to vector<4x256xf32>
    %66 = arith.select %64, %60, %65 : vector<4x256xi1>, vector<4x256xf32>
    %67 = arith.truncf %66 : vector<4x256xf32> to vector<4x256xbf16>
    %c12 = arith.constant 12 : index
    %c0_21 = arith.constant 0 : index
    %68 = vector.load %arg9[%c12, %c0_21] : memref<36x256xbf16, #tpu.memory_space<vmem>>, vector<4x256xbf16>
    tpu.vector_store %arg9[%c12, %c0_21], %67 {strides = array<i32>} : memref<36x256xbf16, #tpu.memory_space<vmem>>, vector<4x256xbf16>,
    %69 = arith.truncf %18 : vector<4x256xf32> to vector<4x256xbf16>
    %c16 = arith.constant 16 : index
    %c0_22 = arith.constant 0 : index
    %70 = vector.load %arg9[%c16, %c0_22] : memref<36x256xbf16, #tpu.memory_space<vmem>>, vector<4x256xbf16>
    tpu.vector_store %arg9[%c16, %c0_22], %69 {strides = array<i32>} : memref<36x256xbf16, #tpu.memory_space<vmem>>, vector<4x256xbf16>,
    %71 = vector.extract_strided_slice %18 {offsets = [0, 1], sizes = [4, 255], strides = [1, 1]} : vector<4x256xf32> to vector<4x255xf32>
    %cst_23 = arith.constant 0.000000e+00 : f32
    %72 = vector.broadcast %cst_23 : f32 to vector<4x1xf32>
    %73 = tpu.concatenate %71, %72 in 1 : vector<4x255xf32>, vector<4x1xf32> -> vector<4x256xf32>
    %c15_i32_24 = arith.constant 15 : i32
    %74 = vector.broadcast %c15_i32_24 : i32 to vector<1x256xi32>
    %75 = arith.cmpi slt, %16, %74 : vector<1x256xi32>
    %cst_25 = arith.constant 0.000000e+00 : f32
    %76 = vector.shape_cast %75 : vector<1x256xi1> to vector<1x256xi1>
    %77 = vector.broadcast %76 : vector<1x256xi1> to vector<4x256xi1>
    %78 = vector.broadcast %cst_25 : f32 to vector<4x256xf32>
    %79 = arith.select %77, %73, %78 : vector<4x256xi1>, vector<4x256xf32>
    %80 = arith.truncf %79 : vector<4x256xf32> to vector<4x256xbf16>
    %c20 = arith.constant 20 : index
    %c0_26 = arith.constant 0 : index
    %81 = vector.load %arg9[%c20, %c0_26] : memref<36x256xbf16, #tpu.memory_space<vmem>>, vector<4x256xbf16>
    tpu.vector_store %arg9[%c20, %c0_26], %80 {strides = array<i32>} : memref<36x256xbf16, #tpu.memory_space<vmem>>, vector<4x256xbf16>,
    %82 = vector.extract_strided_slice %18 {offsets = [0, 15], sizes = [4, 241], strides = [1, 1]} : vector<4x256xf32> to vector<4x241xf32>
    %cst_27 = arith.constant 0.000000e+00 : f32
    %83 = vector.broadcast %cst_27 : f32 to vector<4x15xf32>
    %84 = tpu.concatenate %82, %83 in 1 : vector<4x241xf32>, vector<4x15xf32> -> vector<4x256xf32>
    %c1_i32_28 = arith.constant 1 : i32
    %85 = vector.broadcast %c1_i32_28 : i32 to vector<1x256xi32>
    %86 = arith.cmpi sge, %16, %85 : vector<1x256xi32>
    %c240_i32 = arith.constant 240 : i32
    %87 = vector.broadcast %c240_i32 : i32 to vector<1x256xi32>
    %88 = arith.cmpi slt, %0, %87 : vector<1x256xi32>
    %89 = arith.andi %86, %88 : vector<1x256xi1>
    %cst_29 = arith.constant 0.000000e+00 : f32
    %90 = vector.shape_cast %89 : vector<1x256xi1> to vector<1x256xi1>
    %91 = vector.broadcast %90 : vector<1x256xi1> to vector<4x256xi1>
    %92 = vector.broadcast %cst_29 : f32 to vector<4x256xf32>
    %93 = arith.select %91, %84, %92 : vector<4x256xi1>, vector<4x256xf32>
    %94 = arith.truncf %93 : vector<4x256xf32> to vector<4x256xbf16>
    %c24 = arith.constant 24 : index
    %c0_30 = arith.constant 0 : index
    %95 = vector.load %arg9[%c24, %c0_30] : memref<36x256xbf16, #tpu.memory_space<vmem>>, vector<4x256xbf16>
    tpu.vector_store %arg9[%c24, %c0_30], %94 {strides = array<i32>} : memref<36x256xbf16, #tpu.memory_space<vmem>>, vector<4x256xbf16>,
    %96 = vector.extract_strided_slice %18 {offsets = [0, 16], sizes = [4, 240], strides = [1, 1]} : vector<4x256xf32> to vector<4x240xf32>
    %cst_31 = arith.constant 0.000000e+00 : f32
    %97 = vector.broadcast %cst_31 : f32 to vector<4x16xf32>
    %98 = tpu.concatenate %96, %97 in 1 : vector<4x240xf32>, vector<4x16xf32> -> vector<4x256xf32>
    %c240_i32_32 = arith.constant 240 : i32
    %99 = vector.broadcast %c240_i32_32 : i32 to vector<1x256xi32>
    %100 = arith.cmpi slt, %0, %99 : vector<1x256xi32>
    %cst_33 = arith.constant 0.000000e+00 : f32
    %101 = vector.shape_cast %100 : vector<1x256xi1> to vector<1x256xi1>
    %102 = vector.broadcast %101 : vector<1x256xi1> to vector<4x256xi1>
    %103 = vector.broadcast %cst_33 : f32 to vector<4x256xf32>
    %104 = arith.select %102, %98, %103 : vector<4x256xi1>, vector<4x256xf32>
    %105 = arith.truncf %104 : vector<4x256xf32> to vector<4x256xbf16>
    %c28 = arith.constant 28 : index
    %c0_34 = arith.constant 0 : index
    %106 = vector.load %arg9[%c28, %c0_34] : memref<36x256xbf16, #tpu.memory_space<vmem>>, vector<4x256xbf16>
    tpu.vector_store %arg9[%c28, %c0_34], %105 {strides = array<i32>} : memref<36x256xbf16, #tpu.memory_space<vmem>>, vector<4x256xbf16>,
    %107 = vector.extract_strided_slice %18 {offsets = [0, 17], sizes = [4, 239], strides = [1, 1]} : vector<4x256xf32> to vector<4x239xf32>
    %cst_35 = arith.constant 0.000000e+00 : f32
    %108 = vector.broadcast %cst_35 : f32 to vector<4x17xf32>
    %109 = tpu.concatenate %107, %108 in 1 : vector<4x239xf32>, vector<4x17xf32> -> vector<4x256xf32>
    %c15_i32_36 = arith.constant 15 : i32
    %110 = vector.broadcast %c15_i32_36 : i32 to vector<1x256xi32>
    %111 = arith.cmpi slt, %16, %110 : vector<1x256xi32>
    %c240_i32_37 = arith.constant 240 : i32
    %112 = vector.broadcast %c240_i32_37 : i32 to vector<1x256xi32>
    %113 = arith.cmpi slt, %0, %112 : vector<1x256xi32>
    %114 = arith.andi %111, %113 : vector<1x256xi1>
    %cst_38 = arith.constant 0.000000e+00 : f32
    %115 = vector.shape_cast %114 : vector<1x256xi1> to vector<1x256xi1>
    %116 = vector.broadcast %115 : vector<1x256xi1> to vector<4x256xi1>
    %117 = vector.broadcast %cst_38 : f32 to vector<4x256xf32>
    %118 = arith.select %116, %109, %117 : vector<4x256xi1>, vector<4x256xf32>
    %119 = arith.truncf %118 : vector<4x256xf32> to vector<4x256xbf16>
    %c32 = arith.constant 32 : index
    %c0_39 = arith.constant 0 : index
    %120 = vector.load %arg9[%c32, %c0_39] : memref<36x256xbf16, #tpu.memory_space<vmem>>, vector<4x256xbf16>
    tpu.vector_store %arg9[%c32, %c0_39], %119 {strides = array<i32>} : memref<36x256xbf16, #tpu.memory_space<vmem>>, vector<4x256xbf16>,
    %c0_40 = arith.constant 0 : index
    %c0_41 = arith.constant 0 : index
    %121 = vector.load %arg2[%c0_40, %c0_41] : memref<4x36xbf16, #tpu.memory_space<vmem>>, vector<4x36xbf16>
    %c0_42 = arith.constant 0 : index
    %c0_43 = arith.constant 0 : index
    %122 = vector.load %arg9[%c0_42, %c0_43] : memref<36x256xbf16, #tpu.memory_space<vmem>>, vector<36x256xbf16>
    %cst_44 = arith.constant dense<0.000000e+00> : vector<4x256xf32>
    %123 = tpu.matmul %121, %122, %cst_44 {dimension_numbers = #tpu.dot_dimension_numbers<[1], [0], [0], [1], [0, 0, 1, 1], [], []>} : vector<4x36xbf16>, vector<36x256xbf16>, vector<4x256xf32> -> vector<4x256xf32>
    %c0_45 = arith.constant 0 : index
    %c0_46 = arith.constant 0 : index
    %124 = vector.load %arg4[%c0_45, %c0_46] : memref<4x1xf32, #tpu.memory_space<vmem>>, vector<4x1xf32>
    %125 = vector.broadcast %124 : vector<4x1xf32> to vector<4x256xf32>
    %126 = arith.mulf %123, %125 : vector<4x256xf32>
    %c0_47 = arith.constant 0 : index
    %c0_48 = arith.constant 0 : index
    %127 = vector.load %arg5[%c0_47, %c0_48] : memref<4x1xf32, #tpu.memory_space<vmem>>, vector<4x1xf32>
    %128 = vector.broadcast %127 : vector<4x1xf32> to vector<4x256xf32>
    %129 = arith.addf %126, %128 : vector<4x256xf32>
    %cst_49 = arith.constant 0.000000e+00 : f32
    %130 = vector.broadcast %cst_49 : f32 to vector<4x256xf32>
    %131 = arith.maximumf %129, %130 : vector<4x256xf32>
    %cst_50 = arith.constant 0.000000e+00 : f32
    %132 = vector.broadcast %cst_50 : f32 to vector<4x17xf32>
    %133 = vector.extract_strided_slice %131 {offsets = [0, 0], sizes = [4, 239], strides = [1, 1]} : vector<4x256xf32> to vector<4x239xf32>
    %134 = tpu.concatenate %132, %133 in 1 : vector<4x17xf32>, vector<4x239xf32> -> vector<4x256xf32>
    %c1_i32_51 = arith.constant 1 : i32
    %135 = vector.broadcast %c1_i32_51 : i32 to vector<1x256xi32>
    %136 = arith.cmpi sge, %16, %135 : vector<1x256xi32>
    %c16_i32_52 = arith.constant 16 : i32
    %137 = vector.broadcast %c16_i32_52 : i32 to vector<1x256xi32>
    %138 = arith.cmpi sge, %0, %137 : vector<1x256xi32>
    %139 = arith.andi %136, %138 : vector<1x256xi1>
    %cst_53 = arith.constant 0.000000e+00 : f32
    %140 = vector.shape_cast %139 : vector<1x256xi1> to vector<1x256xi1>
    %141 = vector.broadcast %140 : vector<1x256xi1> to vector<4x256xi1>
    %142 = vector.broadcast %cst_53 : f32 to vector<4x256xf32>
    %143 = arith.select %141, %134, %142 : vector<4x256xi1>, vector<4x256xf32>
    %144 = arith.truncf %143 : vector<4x256xf32> to vector<4x256xbf16>
    %c0_54 = arith.constant 0 : index
    %c0_55 = arith.constant 0 : index
    %145 = vector.load %arg9[%c0_54, %c0_55] : memref<36x256xbf16, #tpu.memory_space<vmem>>, vector<4x256xbf16>
    tpu.vector_store %arg9[%c0_54, %c0_55], %144 {strides = array<i32>} : memref<36x256xbf16, #tpu.memory_space<vmem>>, vector<4x256xbf16>,
    %cst_56 = arith.constant 0.000000e+00 : f32
    %146 = vector.broadcast %cst_56 : f32 to vector<4x16xf32>
    %147 = vector.extract_strided_slice %131 {offsets = [0, 0], sizes = [4, 240], strides = [1, 1]} : vector<4x256xf32> to vector<4x240xf32>
    %148 = tpu.concatenate %146, %147 in 1 : vector<4x16xf32>, vector<4x240xf32> -> vector<4x256xf32>
    %c16_i32_57 = arith.constant 16 : i32
    %149 = vector.broadcast %c16_i32_57 : i32 to vector<1x256xi32>
    %150 = arith.cmpi sge, %0, %149 : vector<1x256xi32>
    %cst_58 = arith.constant 0.000000e+00 : f32
    %151 = vector.shape_cast %150 : vector<1x256xi1> to vector<1x256xi1>
    %152 = vector.broadcast %151 : vector<1x256xi1> to vector<4x256xi1>
    %153 = vector.broadcast %cst_58 : f32 to vector<4x256xf32>
    %154 = arith.select %152, %148, %153 : vector<4x256xi1>, vector<4x256xf32>
    %155 = arith.truncf %154 : vector<4x256xf32> to vector<4x256xbf16>
    %c4_59 = arith.constant 4 : index
    %c0_60 = arith.constant 0 : index
    %156 = vector.load %arg9[%c4_59, %c0_60] : memref<36x256xbf16, #tpu.memory_space<vmem>>, vector<4x256xbf16>
    tpu.vector_store %arg9[%c4_59, %c0_60], %155 {strides = array<i32>} : memref<36x256xbf16, #tpu.memory_space<vmem>>, vector<4x256xbf16>,
    %cst_61 = arith.constant 0.000000e+00 : f32
    %157 = vector.broadcast %cst_61 : f32 to vector<4x15xf32>
    %158 = vector.extract_strided_slice %131 {offsets = [0, 0], sizes = [4, 241], strides = [1, 1]} : vector<4x256xf32> to vector<4x241xf32>
    %159 = tpu.concatenate %157, %158 in 1 : vector<4x15xf32>, vector<4x241xf32> -> vector<4x256xf32>
    %c15_i32_62 = arith.constant 15 : i32
    %160 = vector.broadcast %c15_i32_62 : i32 to vector<1x256xi32>
    %161 = arith.cmpi slt, %16, %160 : vector<1x256xi32>
    %c16_i32_63 = arith.constant 16 : i32
    %162 = vector.broadcast %c16_i32_63 : i32 to vector<1x256xi32>
    %163 = arith.cmpi sge, %0, %162 : vector<1x256xi32>
    %164 = arith.andi %161, %163 : vector<1x256xi1>
    %cst_64 = arith.constant 0.000000e+00 : f32
    %165 = vector.shape_cast %164 : vector<1x256xi1> to vector<1x256xi1>
    %166 = vector.broadcast %165 : vector<1x256xi1> to vector<4x256xi1>
    %167 = vector.broadcast %cst_64 : f32 to vector<4x256xf32>
    %168 = arith.select %166, %159, %167 : vector<4x256xi1>, vector<4x256xf32>
    %169 = arith.truncf %168 : vector<4x256xf32> to vector<4x256xbf16>
    %c8_65 = arith.constant 8 : index
    %c0_66 = arith.constant 0 : index
    %170 = vector.load %arg9[%c8_65, %c0_66] : memref<36x256xbf16, #tpu.memory_space<vmem>>, vector<4x256xbf16>
    tpu.vector_store %arg9[%c8_65, %c0_66], %169 {strides = array<i32>} : memref<36x256xbf16, #tpu.memory_space<vmem>>, vector<4x256xbf16>,
    %cst_67 = arith.constant 0.000000e+00 : f32
    %171 = vector.broadcast %cst_67 : f32 to vector<4x1xf32>
    %172 = vector.extract_strided_slice %131 {offsets = [0, 0], sizes = [4, 255], strides = [1, 1]} : vector<4x256xf32> to vector<4x255xf32>
    %173 = tpu.concatenate %171, %172 in 1 : vector<4x1xf32>, vector<4x255xf32> -> vector<4x256xf32>
    %c1_i32_68 = arith.constant 1 : i32
    %174 = vector.broadcast %c1_i32_68 : i32 to vector<1x256xi32>
    %175 = arith.cmpi sge, %16, %174 : vector<1x256xi32>
    %cst_69 = arith.constant 0.000000e+00 : f32
    %176 = vector.shape_cast %175 : vector<1x256xi1> to vector<1x256xi1>
    %177 = vector.broadcast %176 : vector<1x256xi1> to vector<4x256xi1>
    %178 = vector.broadcast %cst_69 : f32 to vector<4x256xf32>
    %179 = arith.select %177, %173, %178 : vector<4x256xi1>, vector<4x256xf32>
    %180 = arith.truncf %179 : vector<4x256xf32> to vector<4x256xbf16>
    %c12_70 = arith.constant 12 : index
    %c0_71 = arith.constant 0 : index
    %181 = vector.load %arg9[%c12_70, %c0_71] : memref<36x256xbf16, #tpu.memory_space<vmem>>, vector<4x256xbf16>
    tpu.vector_store %arg9[%c12_70, %c0_71], %180 {strides = array<i32>} : memref<36x256xbf16, #tpu.memory_space<vmem>>, vector<4x256xbf16>,
    %182 = arith.truncf %131 : vector<4x256xf32> to vector<4x256xbf16>
    %c16_72 = arith.constant 16 : index
    %c0_73 = arith.constant 0 : index
    %183 = vector.load %arg9[%c16_72, %c0_73] : memref<36x256xbf16, #tpu.memory_space<vmem>>, vector<4x256xbf16>
    tpu.vector_store %arg9[%c16_72, %c0_73], %182 {strides = array<i32>} : memref<36x256xbf16, #tpu.memory_space<vmem>>, vector<4x256xbf16>,
    %184 = vector.extract_strided_slice %131 {offsets = [0, 1], sizes = [4, 255], strides = [1, 1]} : vector<4x256xf32> to vector<4x255xf32>
    %cst_74 = arith.constant 0.000000e+00 : f32
    %185 = vector.broadcast %cst_74 : f32 to vector<4x1xf32>
    %186 = tpu.concatenate %184, %185 in 1 : vector<4x255xf32>, vector<4x1xf32> -> vector<4x256xf32>
    %c15_i32_75 = arith.constant 15 : i32
    %187 = vector.broadcast %c15_i32_75 : i32 to vector<1x256xi32>
    %188 = arith.cmpi slt, %16, %187 : vector<1x256xi32>
    %cst_76 = arith.constant 0.000000e+00 : f32
    %189 = vector.shape_cast %188 : vector<1x256xi1> to vector<1x256xi1>
    %190 = vector.broadcast %189 : vector<1x256xi1> to vector<4x256xi1>
    %191 = vector.broadcast %cst_76 : f32 to vector<4x256xf32>
    %192 = arith.select %190, %186, %191 : vector<4x256xi1>, vector<4x256xf32>
    %193 = arith.truncf %192 : vector<4x256xf32> to vector<4x256xbf16>
    %c20_77 = arith.constant 20 : index
    %c0_78 = arith.constant 0 : index
    %194 = vector.load %arg9[%c20_77, %c0_78] : memref<36x256xbf16, #tpu.memory_space<vmem>>, vector<4x256xbf16>
    tpu.vector_store %arg9[%c20_77, %c0_78], %193 {strides = array<i32>} : memref<36x256xbf16, #tpu.memory_space<vmem>>, vector<4x256xbf16>,
    %195 = vector.extract_strided_slice %131 {offsets = [0, 15], sizes = [4, 241], strides = [1, 1]} : vector<4x256xf32> to vector<4x241xf32>
    %cst_79 = arith.constant 0.000000e+00 : f32
    %196 = vector.broadcast %cst_79 : f32 to vector<4x15xf32>
    %197 = tpu.concatenate %195, %196 in 1 : vector<4x241xf32>, vector<4x15xf32> -> vector<4x256xf32>
    %c1_i32_80 = arith.constant 1 : i32
    %198 = vector.broadcast %c1_i32_80 : i32 to vector<1x256xi32>
    %199 = arith.cmpi sge, %16, %198 : vector<1x256xi32>
    %c240_i32_81 = arith.constant 240 : i32
    %200 = vector.broadcast %c240_i32_81 : i32 to vector<1x256xi32>
    %201 = arith.cmpi slt, %0, %200 : vector<1x256xi32>
    %202 = arith.andi %199, %201 : vector<1x256xi1>
    %cst_82 = arith.constant 0.000000e+00 : f32
    %203 = vector.shape_cast %202 : vector<1x256xi1> to vector<1x256xi1>
    %204 = vector.broadcast %203 : vector<1x256xi1> to vector<4x256xi1>
    %205 = vector.broadcast %cst_82 : f32 to vector<4x256xf32>
    %206 = arith.select %204, %197, %205 : vector<4x256xi1>, vector<4x256xf32>
    %207 = arith.truncf %206 : vector<4x256xf32> to vector<4x256xbf16>
    %c24_83 = arith.constant 24 : index
    %c0_84 = arith.constant 0 : index
    %208 = vector.load %arg9[%c24_83, %c0_84] : memref<36x256xbf16, #tpu.memory_space<vmem>>, vector<4x256xbf16>
    tpu.vector_store %arg9[%c24_83, %c0_84], %207 {strides = array<i32>} : memref<36x256xbf16, #tpu.memory_space<vmem>>, vector<4x256xbf16>,
    %209 = vector.extract_strided_slice %131 {offsets = [0, 16], sizes = [4, 240], strides = [1, 1]} : vector<4x256xf32> to vector<4x240xf32>
    %cst_85 = arith.constant 0.000000e+00 : f32
    %210 = vector.broadcast %cst_85 : f32 to vector<4x16xf32>
    %211 = tpu.concatenate %209, %210 in 1 : vector<4x240xf32>, vector<4x16xf32> -> vector<4x256xf32>
    %c240_i32_86 = arith.constant 240 : i32
    %212 = vector.broadcast %c240_i32_86 : i32 to vector<1x256xi32>
    %213 = arith.cmpi slt, %0, %212 : vector<1x256xi32>
    %cst_87 = arith.constant 0.000000e+00 : f32
    %214 = vector.shape_cast %213 : vector<1x256xi1> to vector<1x256xi1>
    %215 = vector.broadcast %214 : vector<1x256xi1> to vector<4x256xi1>
    %216 = vector.broadcast %cst_87 : f32 to vector<4x256xf32>
    %217 = arith.select %215, %211, %216 : vector<4x256xi1>, vector<4x256xf32>
    %218 = arith.truncf %217 : vector<4x256xf32> to vector<4x256xbf16>
    %c28_88 = arith.constant 28 : index
    %c0_89 = arith.constant 0 : index
    %219 = vector.load %arg9[%c28_88, %c0_89] : memref<36x256xbf16, #tpu.memory_space<vmem>>, vector<4x256xbf16>
    tpu.vector_store %arg9[%c28_88, %c0_89], %218 {strides = array<i32>} : memref<36x256xbf16, #tpu.memory_space<vmem>>, vector<4x256xbf16>,
    %220 = vector.extract_strided_slice %131 {offsets = [0, 17], sizes = [4, 239], strides = [1, 1]} : vector<4x256xf32> to vector<4x239xf32>
    %cst_90 = arith.constant 0.000000e+00 : f32
    %221 = vector.broadcast %cst_90 : f32 to vector<4x17xf32>
    %222 = tpu.concatenate %220, %221 in 1 : vector<4x239xf32>, vector<4x17xf32> -> vector<4x256xf32>
    %c15_i32_91 = arith.constant 15 : i32
    %223 = vector.broadcast %c15_i32_91 : i32 to vector<1x256xi32>
    %224 = arith.cmpi slt, %16, %223 : vector<1x256xi32>
    %c240_i32_92 = arith.constant 240 : i32
    %225 = vector.broadcast %c240_i32_92 : i32 to vector<1x256xi32>
    %226 = arith.cmpi slt, %0, %225 : vector<1x256xi32>
    %227 = arith.andi %224, %226 : vector<1x256xi1>
    %cst_93 = arith.constant 0.000000e+00 : f32
    %228 = vector.shape_cast %227 : vector<1x256xi1> to vector<1x256xi1>
    %229 = vector.broadcast %228 : vector<1x256xi1> to vector<4x256xi1>
    %230 = vector.broadcast %cst_93 : f32 to vector<4x256xf32>
    %231 = arith.select %229, %222, %230 : vector<4x256xi1>, vector<4x256xf32>
    %232 = arith.truncf %231 : vector<4x256xf32> to vector<4x256xbf16>
    %c32_94 = arith.constant 32 : index
    %c0_95 = arith.constant 0 : index
    %233 = vector.load %arg9[%c32_94, %c0_95] : memref<36x256xbf16, #tpu.memory_space<vmem>>, vector<4x256xbf16>
    tpu.vector_store %arg9[%c32_94, %c0_95], %232 {strides = array<i32>} : memref<36x256xbf16, #tpu.memory_space<vmem>>, vector<4x256xbf16>,
    %c0_96 = arith.constant 0 : index
    %c0_97 = arith.constant 0 : index
    %234 = vector.load %arg3[%c0_96, %c0_97] : memref<4x36xbf16, #tpu.memory_space<vmem>>, vector<4x36xbf16>
    %c0_98 = arith.constant 0 : index
    %c0_99 = arith.constant 0 : index
    %235 = vector.load %arg9[%c0_98, %c0_99] : memref<36x256xbf16, #tpu.memory_space<vmem>>, vector<36x256xbf16>
    %cst_100 = arith.constant dense<0.000000e+00> : vector<4x256xf32>
    %236 = tpu.matmul %234, %235, %cst_100 {dimension_numbers = #tpu.dot_dimension_numbers<[1], [0], [0], [1], [0, 0, 1, 1], [], []>} : vector<4x36xbf16>, vector<36x256xbf16>, vector<4x256xf32> -> vector<4x256xf32>
    %c0_101 = arith.constant 0 : index
    %c0_102 = arith.constant 0 : index
    %237 = vector.load %arg6[%c0_101, %c0_102] : memref<4x1xf32, #tpu.memory_space<vmem>>, vector<4x1xf32>
    %238 = vector.broadcast %237 : vector<4x1xf32> to vector<4x256xf32>
    %239 = arith.mulf %236, %238 : vector<4x256xf32>
    %c0_103 = arith.constant 0 : index
    %c0_104 = arith.constant 0 : index
    %240 = vector.load %arg7[%c0_103, %c0_104] : memref<4x1xf32, #tpu.memory_space<vmem>>, vector<4x1xf32>
    %241 = vector.broadcast %240 : vector<4x1xf32> to vector<4x256xf32>
    %242 = arith.addf %239, %241 : vector<4x256xf32>
    %243 = arith.addf %242, %18 : vector<4x256xf32>
    %cst_105 = arith.constant 0.000000e+00 : f32
    %244 = vector.broadcast %cst_105 : f32 to vector<4x256xf32>
    %245 = arith.maximumf %243, %244 : vector<4x256xf32>
    %c0_106 = arith.constant 0 : index
    %c0_107 = arith.constant 0 : index
    %c0_108 = arith.constant 0 : index
    %246 = vector.load %arg8[%c0_106, %c0_107, %c0_108] : memref<1x4x256xf32, #tpu.memory_space<vmem>>, vector<1x4x256xf32>
    %247 = vector.shape_cast %246 : vector<1x4x256xf32> to vector<4x256xf32>
    %248 = vector.shape_cast %245 : vector<4x256xf32> to vector<1x4x256xf32>
    tpu.vector_store %arg8[%c0_106, %c0_107, %c0_108], %248 {strides = array<i32>} : memref<1x4x256xf32, #tpu.memory_space<vmem>>, vector<1x4x256xf32>,
    return
  }
  func.func @transform_0(%arg0: i32) -> (i32, i32, i32) {
    %c0_i32 = arith.constant 0 : i32
    %c0_i32_0 = arith.constant 0 : i32
    %c0_i32_1 = arith.constant 0 : i32
    return %arg0, %c0_i32, %c0_i32_0 : i32, i32, i32
  }
  func.func @transform_1(%arg0: i32) -> (i32, i32) {
    %c0_i32 = arith.constant 0 : i32
    %c0_i32_0 = arith.constant 0 : i32
    %c0_i32_1 = arith.constant 0 : i32
    return %c0_i32, %c0_i32_0 : i32, i32
  }
  func.func @transform_2(%arg0: i32) -> (i32, i32) {
    %c0_i32 = arith.constant 0 : i32
    %c0_i32_0 = arith.constant 0 : i32
    %c0_i32_1 = arith.constant 0 : i32
    return %c0_i32, %c0_i32_0 : i32, i32
  }
  func.func @transform_3(%arg0: i32) -> (i32, i32) {
    %c0_i32 = arith.constant 0 : i32
    %c0_i32_0 = arith.constant 0 : i32
    %c0_i32_1 = arith.constant 0 : i32
    return %c0_i32, %c0_i32_0 : i32, i32
  }
  func.func @transform_4(%arg0: i32) -> (i32, i32) {
    %c0_i32 = arith.constant 0 : i32
    %c0_i32_0 = arith.constant 0 : i32
    %c0_i32_1 = arith.constant 0 : i32
    return %c0_i32, %c0_i32_0 : i32, i32
  }
  func.func @transform_5(%arg0: i32) -> (i32, i32) {
    %c0_i32 = arith.constant 0 : i32
    %c0_i32_0 = arith.constant 0 : i32
    %c0_i32_1 = arith.constant 0 : i32
    return %c0_i32, %c0_i32_0 : i32, i32
  }
  func.func @transform_6(%arg0: i32) -> (i32, i32) {
    %c0_i32 = arith.constant 0 : i32
    %c0_i32_0 = arith.constant 0 : i32
    %c0_i32_1 = arith.constant 0 : i32
    return %c0_i32, %c0_i32_0 : i32, i32
  }
  func.func @transform_7(%arg0: i32) -> (i32, i32, i32) {
    %c0_i32 = arith.constant 0 : i32
    %c0_i32_0 = arith.constant 0 : i32
    %c0_i32_1 = arith.constant 0 : i32
    return %arg0, %c0_i32, %c0_i32_0 : i32, i32, i32
  }
}

</mosaic_0001>

<llo_original>
// kernel: tpu_custom_call.1
$region0: #{tpu_custom_call.1}
  #allocation0 [shape = 'u32[]', space=smem, size = 0x4, offset = 0x4, fixed_abs, tag = 'smem constant byte address 0x4 - core index']
  #allocation1 [shape = 'u32[72,128]{1,0:T(1,128)}', space=vmem, size = 0x9000, scoped, tag = 'internal scratch']
  #allocation2 [shape = 'bf16[36,256]{1,0:T(8,128)(2,1)}', space=vmem, size = 0x5000, scoped, tag = 'scratch operand']
  %s0 = inlined_call_operand.hbm [shape: f32[2,4,256], index: 0, kind: input, shape index: {}]
  %s1 = inlined_call_operand.vmem [shape: bf16[4,36], index: 1, kind: input, shape index: {}]
  %s2 = inlined_call_operand.vmem [shape: bf16[4,36], index: 2, kind: input, shape index: {}]
  %s3 = inlined_call_operand.vmem [shape: f32[4,1], index: 3, kind: input, shape index: {}]
  %s4 = inlined_call_operand.vmem [shape: f32[4,1], index: 4, kind: input, shape index: {}]
  %s5 = inlined_call_operand.vmem [shape: f32[4,1], index: 5, kind: input, shape index: {}]
  %s6 = inlined_call_operand.vmem [shape: f32[4,1], index: 6, kind: input, shape index: {}]
  %s7 = inlined_call_operand.hbm [shape: f32[2,4,256], index: 7, kind: output, shape index: {}]
  %s8 = sld [smem:[#allocation0]]
  $region65: #{tpu_custom_call.1} parent=0
    _
  %s10 = ssub.s32 1, %s8
  %s11 = scalar_select 0, %s10, %s8
  $region1: #{tpu_custom_call.1} parent=0
    #allocation3 [shape = 'u8[8192]{0}', space=vmem, size = 0x2000, scoped, tag = 'input window, operand 0']
    #allocation4 [shape = 's32[2]{0}', space=sflag, size = 0x8, scoped, tag = 'scoped memory for tpu_custom_call.1']
    #allocation5 [shape = 's32[2]{0}', space=sflag, size = 0x8, scoped, tag = 'scoped memory for tpu_custom_call.1']
    #allocation6 [shape = 'u8[8192]{0}', space=vmem, size = 0x2000, scoped, tag = 'output window, operand 0']
    %12 = vsyncpa [#allocation4], 0
    %s13 = scalar_lea.sflag [#allocation4], 1
    %14 = vsyncpa %s13, 0
    %15 = vsyncpa [#allocation5], 0
    %s16 = scalar_lea.sflag [#allocation5], 1
    %17 = vsyncpa %s16, 0
    loop: start=0, step=1, limit=4
    $region2: #{tpu_custom_call.1} parent=1 // loop_pre_header
      _
    $region3: #{tpu_custom_call.1} parent=1 // loop_header
      %s19 = sphi 0, %s23
      %p20 = scmp.ge.s32.totalorder %s19, 4
      %s29 = sphi 0, %s31
      %s32 = sphi 0, %s29
      %s33 = sphi 0, %s32
      %s49 = sphi 0, %s33
      %s53 = sphi 0, %s53
      %s55 = sphi 0, %s53
      %s56 = sphi 0, %s55
      %s70 = sphi 0, %s56
      %s74 = sphi 0, %s74
      %s76 = sphi 0, %s74
      %s77 = sphi 0, %s76
      %s91 = sphi 0, %s77
      %s95 = sphi 0, %s95
      %s97 = sphi 0, %s95
      %s98 = sphi 0, %s97
      %s112 = sphi 0, %s98
      %s116 = sphi 0, %s116
      %s118 = sphi 0, %s116
      %s119 = sphi 0, %s118
      %s133 = sphi 0, %s119
      %s137 = sphi 0, %s137
      %s139 = sphi 0, %s137
      %s140 = sphi 0, %s139
      %s154 = sphi 0, %s140
      %s158 = sphi 0, %s158
      %s160 = sphi 0, %s158
      %s161 = sphi 0, %s160
      %s175 = sphi 0, %s161
      %s181 = sphi 0, %s183
      %s184 = sphi 0, %s181
      %s185 = sphi 0, %s184
      %s201 = sphi 0, %s185
    $region4: #{tpu_custom_call.1} parent=1 // loop_header_branch
      %22 = sbr.rel (%p20) target = $region8
    $region5: #{tpu_custom_call.1} parent=1 // loop_body
      %s24 = ssub.s32 %s19, 1
      %s25 = ssub.s32 %s19, 2
      %s26 = sadd.s32 %s19, 1
      %s27 = ssub.s32 %s19, %s26
      %p28 = scmp.eq.s32.totalorder %s27, 0
      %s30 = sadd.s32 %s29, 1
      %s31 = scalar_select %p28, %s29, %s30
      %p34 = pneg %p28
      %p35 = scmp.eq.s32.totalorder %s19, 1
      %p36 = por %p34, %p35
      %p37 = scmp.ne.s32.totalorder %s29, %s32
      %p38 = scmp.eq.s32.totalorder %s19, 0
      %p39 = por %p37, %p38
      %p40 = scmp.ne.s32.totalorder %s29, %s32
      %p41 = scmp.eq.s32.totalorder %s24, 1
      %p42 = por %p40, %p41
      %p43 = scmp.ne.s32.totalorder %s32, %s33
      %p44 = scmp.eq.s32.totalorder %s24, 0
      %p45 = por %p43, %p44
      %p46 = scmp.ne.s32.totalorder %s32, %s33
      %p47 = scmp.eq.s32.totalorder %s25, 1
      %p48 = por %p46, %p47
      %p50 = scmp.ne.s32.totalorder %s33, %s49
      %p51 = scmp.eq.s32.totalorder %s25, 0
      %p52 = por %p50, %p51
      %s54 = sadd.s32 %s53, 1
      %p57 = scmp.eq.s32.totalorder %s19, 1
      %p58 = scmp.ne.s32.totalorder %s53, %s55
      %p59 = scmp.eq.s32.totalorder %s19, 0
      %p60 = por %p58, %p59
      %p61 = scmp.ne.s32.totalorder %s53, %s55
      %p62 = scmp.eq.s32.totalorder %s24, 1
      %p63 = por %p61, %p62
      %p64 = scmp.ne.s32.totalorder %s55, %s56
      %p65 = scmp.eq.s32.totalorder %s24, 0
      %p66 = por %p64, %p65
      %p67 = scmp.ne.s32.totalorder %s55, %s56
      %p68 = scmp.eq.s32.totalorder %s25, 1
      %p69 = por %p67, %p68
      %p71 = scmp.ne.s32.totalorder %s56, %s70
      %p72 = scmp.eq.s32.totalorder %s25, 0
      %p73 = por %p71, %p72
      %s75 = sadd.s32 %s74, 1
      %p78 = scmp.eq.s32.totalorder %s19, 1
      %p79 = scmp.ne.s32.totalorder %s74, %s76
      %p80 = scmp.eq.s32.totalorder %s19, 0
      %p81 = por %p79, %p80
      %p82 = scmp.ne.s32.totalorder %s74, %s76
      %p83 = scmp.eq.s32.totalorder %s24, 1
      %p84 = por %p82, %p83
      %p85 = scmp.ne.s32.totalorder %s76, %s77
      %p86 = scmp.eq.s32.totalorder %s24, 0
      %p87 = por %p85, %p86
      %p88 = scmp.ne.s32.totalorder %s76, %s77
      %p89 = scmp.eq.s32.totalorder %s25, 1
      %p90 = por %p88, %p89
      %p92 = scmp.ne.s32.totalorder %s77, %s91
      %p93 = scmp.eq.s32.totalorder %s25, 0
      %p94 = por %p92, %p93
      %s96 = sadd.s32 %s95, 1
      %p99 = scmp.eq.s32.totalorder %s19, 1
      %p100 = scmp.ne.s32.totalorder %s95, %s97
      %p101 = scmp.eq.s32.totalorder %s19, 0
      %p102 = por %p100, %p101
      %p103 = scmp.ne.s32.totalorder %s95, %s97
      %p104 = scmp.eq.s32.totalorder %s24, 1
      %p105 = por %p103, %p104
      %p106 = scmp.ne.s32.totalorder %s97, %s98
      %p107 = scmp.eq.s32.totalorder %s24, 0
      %p108 = por %p106, %p107
      %p109 = scmp.ne.s32.totalorder %s97, %s98
      %p110 = scmp.eq.s32.totalorder %s25, 1
      %p111 = por %p109, %p110
      %p113 = scmp.ne.s32.totalorder %s98, %s112
      %p114 = scmp.eq.s32.totalorder %s25, 0
      %p115 = por %p113, %p114
      %s117 = sadd.s32 %s116, 1
      %p120 = scmp.eq.s32.totalorder %s19, 1
      %p121 = scmp.ne.s32.totalorder %s116, %s118
      %p122 = scmp.eq.s32.totalorder %s19, 0
      %p123 = por %p121, %p122
      %p124 = scmp.ne.s32.totalorder %s116, %s118
      %p125 = scmp.eq.s32.totalorder %s24, 1
      %p126 = por %p124, %p125
      %p127 = scmp.ne.s32.totalorder %s118, %s119
      %p128 = scmp.eq.s32.totalorder %s24, 0
      %p129 = por %p127, %p128
      %p130 = scmp.ne.s32.totalorder %s118, %s119
      %p131 = scmp.eq.s32.totalorder %s25, 1
      %p132 = por %p130, %p131
      %p134 = scmp.ne.s32.totalorder %s119, %s133
      %p135 = scmp.eq.s32.totalorder %s25, 0
      %p136 = por %p134, %p135
      %s138 = sadd.s32 %s137, 1
      %p141 = scmp.eq.s32.totalorder %s19, 1
      %p142 = scmp.ne.s32.totalorder %s137, %s139
      %p143 = scmp.eq.s32.totalorder %s19, 0
      %p144 = por %p142, %p143
      %p145 = scmp.ne.s32.totalorder %s137, %s139
      %p146 = scmp.eq.s32.totalorder %s24, 1
      %p147 = por %p145, %p146
      %p148 = scmp.ne.s32.totalorder %s139, %s140
      %p149 = scmp.eq.s32.totalorder %s24, 0
      %p150 = por %p148, %p149
      %p151 = scmp.ne.s32.totalorder %s139, %s140
      %p152 = scmp.eq.s32.totalorder %s25, 1
      %p153 = por %p151, %p152
      %p155 = scmp.ne.s32.totalorder %s140, %s154
      %p156 = scmp.eq.s32.totalorder %s25, 0
      %p157 = por %p155, %p156
      %s159 = sadd.s32 %s158, 1
      %p162 = scmp.eq.s32.totalorder %s19, 1
      %p163 = scmp.ne.s32.totalorder %s158, %s160
      %p164 = scmp.eq.s32.totalorder %s19, 0
      %p165 = por %p163, %p164
      %p166 = scmp.ne.s32.totalorder %s158, %s160
      %p167 = scmp.eq.s32.totalorder %s24, 1
      %p168 = por %p166, %p167
      %p169 = scmp.ne.s32.totalorder %s160, %s161
      %p170 = scmp.eq.s32.totalorder %s24, 0
      %p171 = por %p169, %p170
      %p172 = scmp.ne.s32.totalorder %s160, %s161
      %p173 = scmp.eq.s32.totalorder %s25, 1
      %p174 = por %p172, %p173
      %p176 = scmp.ne.s32.totalorder %s161, %s175
      %p177 = scmp.eq.s32.totalorder %s25, 0
      %p178 = por %p176, %p177
      %s179 = ssub.s32 %s19, %s26
      %p180 = scmp.eq.s32.totalorder %s179, 0
      %s182 = sadd.s32 %s181, 1
      %s183 = scalar_select %p180, %s181, %s182
      %p186 = pneg %p180
      %p187 = scmp.eq.s32.totalorder %s19, 1
      %p188 = por %p186, %p187
      %p189 = scmp.ne.s32.totalorder %s181, %s184
      %p190 = scmp.eq.s32.totalorder %s19, 0
      %p191 = por %p189, %p190
      %p192 = scmp.ne.s32.totalorder %s181, %s184
      %p193 = scmp.eq.s32.totalorder %s24, 1
      %p194 = por %p192, %p193
      %p195 = scmp.ne.s32.totalorder %s184, %s185
      %p196 = scmp.eq.s32.totalorder %s24, 0
      %p197 = por %p195, %p196
      %p198 = scmp.ne.s32.totalorder %s184, %s185
      %p199 = scmp.eq.s32.totalorder %s25, 1
      %p200 = por %p198, %p199
      %p202 = scmp.ne.s32.totalorder %s185, %s201
      %p203 = scmp.eq.s32.totalorder %s25, 0
      %p204 = por %p202, %p203
      %p205 = scmp.le.s32.totalorder 1, %s19
      %p206 = scmp.lt.s32.totalorder %s19, 3
      %p207 = pnand %p205, %p206
      %p208 = pneg %p207
      // Predicated region
      $region9: #{tpu_custom_call.1} parent=5 // pred_check
        _
      $region10: #{tpu_custom_call.1} parent=5 // pred_check_branch
        %210 = sbr.rel (%p207) target = $region12
      $region11: #{tpu_custom_call.1} parent=5 // pred_region
        %s211 = ssub.s32 %s19, 1
        // Predicated region
        $region13: #{tpu_custom_call.1} parent=11 // pred_check
          %p212 = pneg %p66
        $region14: #{tpu_custom_call.1} parent=11 // pred_check_branch
          %214 = sbr.rel (%p212) target = $region16
        $region15: #{tpu_custom_call.1} parent=11 // pred_region
          _
        $region16: #{tpu_custom_call.1} parent=11 // pred_fallthru
          _
        // Predicated region
        $region17: #{tpu_custom_call.1} parent=11 // pred_check
          %p215 = pneg %p87
        $region18: #{tpu_custom_call.1} parent=11 // pred_check_branch
          %217 = sbr.rel (%p215) target = $region20
        $region19: #{tpu_custom_call.1} parent=11 // pred_region
          _
        $region20: #{tpu_custom_call.1} parent=11 // pred_fallthru
          _
        // Predicated region
        $region21: #{tpu_custom_call.1} parent=11 // pred_check
          %p218 = pneg %p108
        $region22: #{tpu_custom_call.1} parent=11 // pred_check_branch
          %220 = sbr.rel (%p218) target = $region24
        $region23: #{tpu_custom_call.1} parent=11 // pred_region
          _
        $region24: #{tpu_custom_call.1} parent=11 // pred_fallthru
          _
        // Predicated region
        $region25: #{tpu_custom_call.1} parent=11 // pred_check
          %p221 = pneg %p129
        $region26: #{tpu_custom_call.1} parent=11 // pred_check_branch
          %223 = sbr.rel (%p221) target = $region28
        $region27: #{tpu_custom_call.1} parent=11 // pred_region
          _
        $region28: #{tpu_custom_call.1} parent=11 // pred_fallthru
          _
        // Predicated region
        $region29: #{tpu_custom_call.1} parent=11 // pred_check
          %p224 = pneg %p150
        $region30: #{tpu_custom_call.1} parent=11 // pred_check_branch
          %226 = sbr.rel (%p224) target = $region32
        $region31: #{tpu_custom_call.1} parent=11 // pred_region
          _
        $region32: #{tpu_custom_call.1} parent=11 // pred_fallthru
          _
        // Predicated region
        $region33: #{tpu_custom_call.1} parent=11 // pred_check
          %p227 = pneg %p171
        $region34: #{tpu_custom_call.1} parent=11 // pred_check_branch
          %229 = sbr.rel (%p227) target = $region36
        $region35: #{tpu_custom_call.1} parent=11 // pred_region
          _
        $region36: #{tpu_custom_call.1} parent=11 // pred_fallthru
          _
      $region12: #{tpu_custom_call.1} parent=5 // pred_fallthru
        _
      %p230 = scmp.lt.s32.totalorder %s19, 2
      // Predicated region
      $region37: #{tpu_custom_call.1} parent=5 // pred_check
        %p231 = pneg %p230
      $region38: #{tpu_custom_call.1} parent=5 // pred_check_branch
        %233 = sbr.rel (%p231) target = $region40
      $region39: #{tpu_custom_call.1} parent=5 // pred_region
        // Predicated region
        $region41: #{tpu_custom_call.1} parent=39 // pred_check
          %p234 = pneg %p39
        $region42: #{tpu_custom_call.1} parent=39 // pred_check_branch
          %236 = sbr.rel (%p234) target = $region44
        $region43: #{tpu_custom_call.1} parent=39 // pred_region
          %s237 = sand.u32 %s29, 1
          %s238 = scalar_lea.sflag [#allocation4], %s237
          %s239 = sand.u32 %s29, 1
          %s240 = smul.addr %s239, 8
          %s241 = scalar_lea.vmem [#allocation3], %s240
          %243 = vsyncadd %s238, 0
          %s244 = smul.addr %s19, 2
          %s245 = smul.addr %s244, 4
          %s246 = scalar_lea.hbm %s0, %s245
          %s248 = sshll.u32 %s246, 4
          %s249 = int_to_ptr.hbm [resolvable:$true] %s248
          %s250 = sshll.u32 %s241, 4
          %s251 = int_to_ptr.vmem [resolvable:$true] %s250
          %253 = dma.hbm_to_vmem [thread:$0]  %s249, 128, %s251, %s238
        $region44: #{tpu_custom_call.1} parent=39 // pred_fallthru
          _
      $region40: #{tpu_custom_call.1} parent=5 // pred_fallthru
        _
      %p254 = scmp.le.s32.totalorder 1, %s19
      %p255 = scmp.lt.s32.totalorder %s19, 3
      %p256 = pnand %p254, %p255
      %p257 = pneg %p256
      // Predicated region
      $region45: #{tpu_custom_call.1} parent=5 // pred_check
        _
      $region46: #{tpu_custom_call.1} parent=5 // pred_check_branch
        %259 = sbr.rel (%p256) target = $region48
      $region47: #{tpu_custom_call.1} parent=5 // pred_region
        %s260 = ssub.s32 %s19, 1
        %s261 = sand.u32 %s32, 1
        %s262 = scalar_lea.sflag [#allocation4], %s261
        %s263 = sand.u32 %s32, 1
        %s264 = smul.addr %s263, 8
        %s265 = scalar_lea.vmem [#allocation3], %s264
        // Predicated region
        $region49: #{tpu_custom_call.1} parent=47 // pred_check
          %p266 = pneg %p45
        $region50: #{tpu_custom_call.1} parent=47 // pred_check_branch
          %268 = sbr.rel (%p266) target = $region52
        $region51: #{tpu_custom_call.1} parent=47 // pred_region
          %270 = dma.done %s262, 128
        $region52: #{tpu_custom_call.1} parent=47 // pred_fallthru
          _
        %s271 = sand.u32 %s32, 1
        %s272 = scalar_lea.sflag [#allocation4], %s271
        %s273 = sand.u32 %s32, 1
        %s274 = smul.addr %s273, 8
        %s275 = scalar_lea.vmem [#allocation3], %s274
        %p276 = pneg %p45
        %p277 = pneg %p42
        %p278 = pneg %p66
        %p279 = pneg %p63
        %p280 = pneg %p87
        %p281 = pneg %p84
        %p282 = pneg %p108
        %p283 = pneg %p105
        %p284 = pneg %p129
        %p285 = pneg %p126
        %p286 = pneg %p150
        %p287 = pneg %p147
        %p288 = pneg %p171
        %p289 = pneg %p168
        %p290 = pneg %p197
        %p291 = pneg %p194
        %s292 = sand.u32 %s184, 1
        %s293 = scalar_lea.sflag [#allocation5], %s292
        %s294 = sand.u32 %s184, 1
        %s295 = smul.addr %s294, 8
        %s296 = scalar_lea.vmem [#allocation6], %s295
        %v298 = vlaneseq
        %v299 = vand.u32 %v298, 127
        %v300 = vadd.s32 %v299, 128
        %vm301 = vcmp.lt.s32.totalorder %v299, 0
        %v302 = vsub.s32 0, %v299
        %v303 = vsel %vm301, %v302, %v299
        %v304 = vshrl.u32 %v303, 4
        %v305 = vand.u32 %v303, 15
        %v306 = vsub.s32 0, %v305
        %v307 = vsel %vm301, %v306, %v305
        %vm308 = vcmp.lt.s32.totalorder %v300, 0
        %v309 = vsub.s32 0, %v300
        %v310 = vsel %vm308, %v309, %v300
        %v311 = vshrl.u32 %v310, 4
        %v312 = vand.u32 %v310, 15
        %v313 = vsub.s32 0, %v312
        %v314 = vsel %vm308, %v313, %v312
        %vm315 = vcmp.ne.s32.totalorder %v307, 0
        %vm316 = vcmp.ne.s32.totalorder %v314, 0
        %vm317 = vcmp.lt.s32.totalorder %v307, 0
        %vm318 = vcmp.lt.s32.totalorder %v314, 0
        %vm319 = vmand %vm317, %vm315
        %vm320 = vmand %vm318, %vm316
        %v321 = vadd.s32 %v307, 16
        %v322 = vadd.s32 %v314, 16
        %v323 = vsel %vm319, %v321, %v307
        %v324 = vsel %vm320, %v322, %v314
        %v325 = vld [vmem:[%s265] sm:$0xff]
        %327 = vst [vmem:[#allocation1] ss:$2 sm:$0xff] %v325
        %v328 = vld.sshfl [vmem:[#allocation1] sm:$0xff pattern:$0x75316420]
        %v329 = vld.sshfl [vmem:[#allocation1 + $0x8] sm:$0xff pattern:$0x75316420]
        %330 = vrot.lane.b32.xlu0 %v328, 17
        %v331 = vpop.permute.xlu0 %330
        %332 = vrot.lane.b32.xlu0 %v329, 17
        %v333 = vpop.permute.xlu0 %332
        %vm334 = vcmask 138240
        %v335 = vsel %vm334, %v331, %v333
        %v338 = vsel %vm334, 0.0, %v331
        %vm339 = vcmp.ge.s32.totalorder %v323, 1
        %vm340 = vcmp.ge.s32.totalorder %v324, 1
        %vm341 = vcmp.ge.s32.totalorder %v299, 16
        %vm342 = vcmp.ge.s32.totalorder %v300, 16
        %vm343 = vmand %vm339, %vm341
        %vm344 = vmand %vm340, %vm342
        %v345 = vsel %vm343, 1, 0
        %v346 = vsel %vm344, 1, 0
        %vm347 = vcmp.eq.s32.totalorder %v345, 1
        %vm348 = vcmp.eq.s32.totalorder %v346, 1
        %v349 = vsel %vm347, %v338, 0.0
        %v350 = vsel %vm348, %v335, 0.0
        %v351 = vpack.c.bf16 %v350, %v349
        %352 = vst [vmem:[#allocation2] sm:$0x33] %v351
        %353 = vst [vmem:[#allocation1] ss:$2 sm:$0xff] %v325
        %v354 = vld.sshfl [vmem:[#allocation1] sm:$0xff pattern:$0x75316420]
        %v355 = vld.sshfl [vmem:[#allocation1 + $0x8] sm:$0xff pattern:$0x75316420]
        %356 = vrot.lane.b32.xlu0 %v354, 16
        %v357 = vpop.permute.xlu0 %356
        %358 = vrot.lane.b32.xlu0 %v355, 16
        %v359 = vpop.permute.xlu0 %358
        %vm360 = vcmask 130048
        %v361 = vsel %vm360, %v357, %v359
        %v364 = vsel %vm360, 0.0, %v357
        %v365 = vsel %vm341, 1, 0
        %v366 = vsel %vm342, 1, 0
        %vm367 = vcmp.eq.s32.totalorder %v365, 1
        %vm368 = vcmp.eq.s32.totalorder %v366, 1
        %v369 = vsel %vm367, %v364, 0.0
        %v370 = vsel %vm368, %v361, 0.0
        %v371 = vpack.c.bf16 %v370, %v369
        %v373 = vrot.slane %v371, 6
        %375 = vst [vmem:[#allocation2] sm:$0xcc] %v373
        %376 = vst [vmem:[#allocation1] ss:$2 sm:$0xff] %v325
        %v377 = vld.sshfl [vmem:[#allocation1] sm:$0xff pattern:$0x75316420]
        %v378 = vld.sshfl [vmem:[#allocation1 + $0x8] sm:$0xff pattern:$0x75316420]
        %379 = vrot.lane.b32.xlu0 %v377, 15
        %v380 = vpop.permute.xlu0 %379
        %381 = vrot.lane.b32.xlu0 %v378, 15
        %v382 = vpop.permute.xlu0 %381
        %vm383 = vcmask 121856
        %v384 = vsel %vm383, %v380, %v382
        %v387 = vsel %vm383, 0.0, %v380
        %vm388 = vcmp.lt.s32.totalorder %v323, 15
        %vm389 = vcmp.lt.s32.totalorder %v324, 15
        %vm390 = vmand %vm388, %vm341
        %vm391 = vmand %vm389, %vm342
        %v392 = vsel %vm390, 1, 0
        %v393 = vsel %vm391, 1, 0
        %vm394 = vcmp.eq.s32.totalorder %v392, 1
        %vm395 = vcmp.eq.s32.totalorder %v393, 1
        %v396 = vsel %vm394, %v387, 0.0
        %v397 = vsel %vm395, %v384, 0.0
        %v398 = vpack.c.bf16 %v397, %v396
        %399 = vst [vmem:[#allocation2 + $0x8] sm:$0x33] %v398
        %400 = vst [vmem:[#allocation1] ss:$2 sm:$0xff] %v325
        %v401 = vld.sshfl [vmem:[#allocation1] sm:$0xff pattern:$0x75316420]
        %v402 = vld.sshfl [vmem:[#allocation1 + $0x8] sm:$0xff pattern:$0x75316420]
        %403 = vrot.lane.b32.xlu0 %v401, 1
        %v404 = vpop.permute.xlu0 %403
        %405 = vrot.lane.b32.xlu0 %v402, 1
        %v406 = vpop.permute.xlu0 %405
        %vm407 = vcmask 7168
        %v408 = vsel %vm407, %v404, %v406
        %v411 = vsel %vm407, 0.0, %v404
        %v412 = vsel %vm339, 1, 0
        %v413 = vsel %vm340, 1, 0
        %vm414 = vcmp.eq.s32.totalorder %v412, 1
        %vm415 = vcmp.eq.s32.totalorder %v413, 1
        %v416 = vsel %vm414, %v411, 0.0
        %v417 = vsel %vm415, %v408, 0.0
        %v418 = vpack.c.bf16 %v417, %v416
        %v420 = vrot.slane %v418, 6
        %422 = vst [vmem:[#allocation2 + $0x8] sm:$0xcc] %v420
        %423 = vst [vmem:[#allocation1] ss:$2 sm:$0xff] %v325
        %v424 = vld.sshfl [vmem:[#allocation1] sm:$0xff pattern:$0x75316420]
        %v425 = vld.sshfl [vmem:[#allocation1 + $0x8] sm:$0xff pattern:$0x75316420]
        %v428 = vpack.c.bf16 %v425, %v424
        %429 = vst [vmem:[#allocation2 + $0x10] sm:$0x33] %v428
        %430 = vst [vmem:[#allocation1] ss:$2 sm:$0xff] %v325
        %v431 = vld.sshfl [vmem:[#allocation1] sm:$0xff pattern:$0x75316420]
        %v432 = vld.sshfl [vmem:[#allocation1 + $0x8] sm:$0xff pattern:$0x75316420]
        %433 = vrot.lane.b32.xlu0 %v431, 127
        %v434 = vpop.permute.xlu0 %433
        %435 = vrot.lane.b32.xlu0 %v432, 127
        %v436 = vpop.permute.xlu0 %435
        %vm437 = vcmask 1039360
        %v438 = vsel %vm437, %v434, %v436
        %v441 = vsel %vm437, %v436, 0.0
        %v442 = vsel %vm388, 1, 0
        %v443 = vsel %vm389, 1, 0
        %vm444 = vcmp.eq.s32.totalorder %v442, 1
        %vm445 = vcmp.eq.s32.totalorder %v443, 1
        %v446 = vsel %vm444, %v438, 0.0
        %v447 = vsel %vm445, %v441, 0.0
        %v448 = vpack.c.bf16 %v447, %v446
        %v450 = vrot.slane %v448, 6
        %452 = vst [vmem:[#allocation2 + $0x10] sm:$0xcc] %v450
        %453 = vst [vmem:[#allocation1] ss:$2 sm:$0xff] %v325
        %v454 = vld.sshfl [vmem:[#allocation1] sm:$0xff pattern:$0x75316420]
        %v455 = vld.sshfl [vmem:[#allocation1 + $0x8] sm:$0xff pattern:$0x75316420]
        %456 = vrot.lane.b32.xlu0 %v454, 113
        %v457 = vpop.permute.xlu0 %456
        %458 = vrot.lane.b32.xlu0 %v455, 113
        %v459 = vpop.permute.xlu0 %458
        %vm460 = vcmask 924672
        %v461 = vsel %vm460, %v457, %v459
        %v464 = vsel %vm460, %v459, 0.0
        %vm465 = vcmp.lt.s32.totalorder %v299, 240
        %vm466 = vcmp.lt.s32.totalorder %v300, 240
        %vm467 = vmand %vm339, %vm465
        %vm468 = vmand %vm340, %vm466
        %v469 = vsel %vm467, 1, 0
        %v470 = vsel %vm468, 1, 0
        %vm471 = vcmp.eq.s32.totalorder %v469, 1
        %vm472 = vcmp.eq.s32.totalorder %v470, 1
        %v473 = vsel %vm471, %v461, 0.0
        %v474 = vsel %vm472, %v464, 0.0
        %v475 = vpack.c.bf16 %v474, %v473
        %476 = vst [vmem:[#allocation2 + $0x18] sm:$0x33] %v475
        %477 = vst [vmem:[#allocation1] ss:$2 sm:$0xff] %v325
        %v478 = vld.sshfl [vmem:[#allocation1] sm:$0xff pattern:$0x75316420]
        %v479 = vld.sshfl [vmem:[#allocation1 + $0x8] sm:$0xff pattern:$0x75316420]
        %480 = vrot.lane.b32.xlu0 %v478, 112
        %v481 = vpop.permute.xlu0 %480
        %482 = vrot.lane.b32.xlu0 %v479, 112
        %v483 = vpop.permute.xlu0 %482
        %vm484 = vcmask 916480
        %v485 = vsel %vm484, %v481, %v483
        %v488 = vsel %vm484, %v483, 0.0
        %v489 = vsel %vm465, 1, 0
        %v490 = vsel %vm466, 1, 0
        %vm491 = vcmp.eq.s32.totalorder %v489, 1
        %vm492 = vcmp.eq.s32.totalorder %v490, 1
        %v493 = vsel %vm491, %v485, 0.0
        %v494 = vsel %vm492, %v488, 0.0
        %v495 = vpack.c.bf16 %v494, %v493
        %v497 = vrot.slane %v495, 6
        %499 = vst [vmem:[#allocation2 + $0x18] sm:$0xcc] %v497
        %500 = vst [vmem:[#allocation1] ss:$2 sm:$0xff] %v325
        %v501 = vld.sshfl [vmem:[#allocation1] sm:$0xff pattern:$0x75316420]
        %v502 = vld.sshfl [vmem:[#allocation1 + $0x8] sm:$0xff pattern:$0x75316420]
        %503 = vrot.lane.b32.xlu0 %v501, 111
        %v504 = vpop.permute.xlu0 %503
        %505 = vrot.lane.b32.xlu0 %v502, 111
        %v506 = vpop.permute.xlu0 %505
        %vm507 = vcmask 908288
        %v508 = vsel %vm507, %v504, %v506
        %v511 = vsel %vm507, %v506, 0.0
        %vm512 = vmand %vm388, %vm465
        %vm513 = vmand %vm389, %vm466
        %v514 = vsel %vm512, 1, 0
        %v515 = vsel %vm513, 1, 0
        %vm516 = vcmp.eq.s32.totalorder %v514, 1
        %vm517 = vcmp.eq.s32.totalorder %v515, 1
        %v518 = vsel %vm516, %v508, 0.0
        %v519 = vsel %vm517, %v511, 0.0
        %v520 = vpack.c.bf16 %v519, %v518
        %521 = vst [vmem:[#allocation2 + $0x20] sm:$0x33] %v520
        %v522 = vld [vmem:[%s1] sm:$0x3]
        %v523 = vld [vmem:[#allocation2] sm:$0xff]
        %v524 = vld [vmem:[#allocation2 + $0x8] sm:$0xff]
        %v525 = vld [vmem:[#allocation2 + $0x10] sm:$0xff]
        %v526 = vld [vmem:[#allocation2 + $0x18] sm:$0xff]
        %v527 = vld [vmem:[#allocation2 + $0x20] sm:$0x33]
        %v533 = vunpack.c.l.b16 %v523
        %v534 = vunpack.c.h.b16 %v523
        %v535 = vunpack.c.l.b16 %v524
        %v536 = vunpack.c.h.b16 %v524
        %v537 = vunpack.c.l.b16 %v525
        %v538 = vunpack.c.h.b16 %v525
        %v539 = vunpack.c.l.b16 %v526
        %v540 = vunpack.c.h.b16 %v526
        %v541 = vunpack.c.l.b16 %v527
        %v542 = vunpack.c.h.b16 %v527
        %v543 = vpack.c.b16 %v535, %v533
        %v544 = vpack.c.b16 %v536, %v534
        %v545 = vpack.c.b16 %v539, %v537
        %v546 = vpack.c.b16 %v540, %v538
        %v547 = vpack.c.b16 %v541, %v541
        %v548 = vpack.c.b16 %v542, %v542
        %vm553 = vcmask 293888
        %v555 = vsel %vm553, %v522, 0
        %vm557 = vcmask 1041408
        %v559 = vsel %vm557, %v547, 0
        %v562 = vsel %vm557, %v548, 0
        %564 = vmatpush.bf16.msra.mxu0 0
        %565 = vmatpush.bf16.msra.mxu0 0
        %566 = vmatpush.bf16.msra.mxu0 0
        %567 = vmatpush.bf16.msra.mxu0 0
        %568 = vmatpush.bf16.msra.mxu0 0
        %569 = vmatpush.bf16.msra.mxu0 %v559
        %570 = vmatpush.bf16.msra.mxu0 %v545
        %571 = vmatpush.bf16.msra.mxu0 %v543
        %572 = vmatmul.bf16.gmra.mxu0 %v555
        %v573 = vpop.f32.mrf.mxu0
        %v574 = vadd.f32 0.0, %v573
        %v575 = vpop.f32.mrf.mxu0
        %576 = vdwg.mxu0
        %577 = vmatpush.bf16.msra.mxu0 0
        %578 = vmatpush.bf16.msra.mxu0 0
        %579 = vmatpush.bf16.msra.mxu0 0
        %580 = vmatpush.bf16.msra.mxu0 0
        %581 = vmatpush.bf16.msra.mxu0 0
        %582 = vmatpush.bf16.msra.mxu0 %v562
        %583 = vmatpush.bf16.msra.mxu0 %v546
        %584 = vmatpush.bf16.msra.mxu0 %v544
        %585 = vmatmul.bf16.gmra.mxu0 %v555
        %v586 = vpop.f32.mrf.mxu0
        %v587 = vadd.f32 0.0, %v586
        %v588 = vpop.f32.mrf.mxu0
        %589 = vdwg.mxu0
        %v590 = vld [vmem:[%s3] sm:$0xf]
        %592 = vset.pattern.permute.xlu0 0
        %593 = vperm.xlu0 %592, %v590
        %v594 = vpop.permute.xlu0 %593
        %v596 = vmul.f32 %v574, %v594
        %v597 = vmul.f32 %v587, %v594
        %v598 = vld [vmem:[%s4] sm:$0xf]
        %600 = vset.pattern.permute.xlu0 0
        %601 = vperm.xlu0 %600, %v598
        %v602 = vpop.permute.xlu0 %601
        %v604 = vadd.f32 %v596, %v602
        %v605 = vadd.f32 %v597, %v602
        %v606 = vmax.f32 %v604, 0.0
        %v607 = vmax.f32 %v605, 0.0
        %610 = vrot.lane.b32.xlu0 %v606, 17
        %v611 = vpop.permute.xlu0 %610
        %612 = vrot.lane.b32.xlu0 %v607, 17
        %v613 = vpop.permute.xlu0 %612
        %v614 = vsel %vm334, %v611, %v613
        %v617 = vsel %vm334, 0.0, %v611
        %v618 = vsel %vm347, %v617, 0.0
        %v619 = vsel %vm348, %v614, 0.0
        %v620 = vpack.c.bf16 %v619, %v618
        %621 = vst [vmem:[#allocation2] sm:$0x33] %v620
        %622 = vrot.lane.b32.xlu0 %v606, 16
        %v623 = vpop.permute.xlu0 %622
        %624 = vrot.lane.b32.xlu0 %v607, 16
        %v625 = vpop.permute.xlu0 %624
        %v626 = vsel %vm360, %v623, %v625
        %v629 = vsel %vm360, 0.0, %v623
        %v630 = vsel %vm367, %v629, 0.0
        %v631 = vsel %vm368, %v626, 0.0
        %v632 = vpack.c.bf16 %v631, %v630
        %v634 = vrot.slane %v632, 6
        %636 = vst [vmem:[#allocation2] sm:$0xcc] %v634
        %637 = vrot.lane.b32.xlu0 %v606, 15
        %v638 = vpop.permute.xlu0 %637
        %639 = vrot.lane.b32.xlu0 %v607, 15
        %v640 = vpop.permute.xlu0 %639
        %v641 = vsel %vm383, %v638, %v640
        %v644 = vsel %vm383, 0.0, %v638
        %v645 = vsel %vm394, %v644, 0.0
        %v646 = vsel %vm395, %v641, 0.0
        %v647 = vpack.c.bf16 %v646, %v645
        %648 = vst [vmem:[#allocation2 + $0x8] sm:$0x33] %v647
        %649 = vrot.lane.b32.xlu0 %v606, 1
        %v650 = vpop.permute.xlu0 %649
        %651 = vrot.lane.b32.xlu0 %v607, 1
        %v652 = vpop.permute.xlu0 %651
        %v653 = vsel %vm407, %v650, %v652
        %v656 = vsel %vm407, 0.0, %v650
        %v657 = vsel %vm414, %v656, 0.0
        %v658 = vsel %vm415, %v653, 0.0
        %v659 = vpack.c.bf16 %v658, %v657
        %v661 = vrot.slane %v659, 6
        %663 = vst [vmem:[#allocation2 + $0x8] sm:$0xcc] %v661
        %v664 = vpack.c.bf16 %v607, %v606
        %665 = vst [vmem:[#allocation2 + $0x10] sm:$0x33] %v664
        %666 = vrot.lane.b32.xlu0 %v606, 127
        %v667 = vpop.permute.xlu0 %666
        %668 = vrot.lane.b32.xlu0 %v607, 127
        %v669 = vpop.permute.xlu0 %668
        %v670 = vsel %vm437, %v667, %v669
        %v673 = vsel %vm437, %v669, 0.0
        %v674 = vsel %vm444, %v670, 0.0
        %v675 = vsel %vm445, %v673, 0.0
        %v676 = vpack.c.bf16 %v675, %v674
        %v678 = vrot.slane %v676, 6
        %680 = vst [vmem:[#allocation2 + $0x10] sm:$0xcc] %v678
        %681 = vrot.lane.b32.xlu0 %v606, 113
        %v682 = vpop.permute.xlu0 %681
        %683 = vrot.lane.b32.xlu0 %v607, 113
        %v684 = vpop.permute.xlu0 %683
        %v685 = vsel %vm460, %v682, %v684
        %v688 = vsel %vm460, %v684, 0.0
        %v689 = vsel %vm471, %v685, 0.0
        %v690 = vsel %vm472, %v688, 0.0
        %v691 = vpack.c.bf16 %v690, %v689
        %692 = vst [vmem:[#allocation2 + $0x18] sm:$0x33] %v691
        %693 = vrot.lane.b32.xlu0 %v606, 112
        %v694 = vpop.permute.xlu0 %693
        %695 = vrot.lane.b32.xlu0 %v607, 112
        %v696 = vpop.permute.xlu0 %695
        %v697 = vsel %vm484, %v694, %v696
        %v700 = vsel %vm484, %v696, 0.0
        %v701 = vsel %vm491, %v697, 0.0
        %v702 = vsel %vm492, %v700, 0.0
        %v703 = vpack.c.bf16 %v702, %v701
        %v705 = vrot.slane %v703, 6
        %707 = vst [vmem:[#allocation2 + $0x18] sm:$0xcc] %v705
        %708 = vrot.lane.b32.xlu0 %v606, 111
        %v709 = vpop.permute.xlu0 %708
        %710 = vrot.lane.b32.xlu0 %v607, 111
        %v711 = vpop.permute.xlu0 %710
        %v712 = vsel %vm507, %v709, %v711
        %v715 = vsel %vm507, %v711, 0.0
        %v716 = vsel %vm516, %v712, 0.0
        %v717 = vsel %vm517, %v715, 0.0
        %v718 = vpack.c.bf16 %v717, %v716
        %719 = vst [vmem:[#allocation2 + $0x20] sm:$0x33] %v718
        %v720 = vld [vmem:[%s2] sm:$0x3]
        %v721 = vld [vmem:[#allocation2] sm:$0xff]
        %v722 = vld [vmem:[#allocation2 + $0x8] sm:$0xff]
        %v723 = vld [vmem:[#allocation2 + $0x10] sm:$0xff]
        %v724 = vld [vmem:[#allocation2 + $0x18] sm:$0xff]
        %v725 = vld [vmem:[#allocation2 + $0x20] sm:$0x33]
        %v731 = vunpack.c.l.b16 %v721
        %v732 = vunpack.c.h.b16 %v721
        %v733 = vunpack.c.l.b16 %v722
        %v734 = vunpack.c.h.b16 %v722
        %v735 = vunpack.c.l.b16 %v723
        %v736 = vunpack.c.h.b16 %v723
        %v737 = vunpack.c.l.b16 %v724
        %v738 = vunpack.c.h.b16 %v724
        %v739 = vunpack.c.l.b16 %v725
        %v740 = vunpack.c.h.b16 %v725
        %v741 = vpack.c.b16 %v733, %v731
        %v742 = vpack.c.b16 %v734, %v732
        %v743 = vpack.c.b16 %v737, %v735
        %v744 = vpack.c.b16 %v738, %v736
        %v745 = vpack.c.b16 %v739, %v739
        %v746 = vpack.c.b16 %v740, %v740
        %v752 = vsel %vm553, %v720, 0
        %v755 = vsel %vm557, %v745, 0
        %v758 = vsel %vm557, %v746, 0
        %760 = vmatpush.bf16.msra.mxu0 0
        %761 = vmatpush.bf16.msra.mxu0 0
        %762 = vmatpush.bf16.msra.mxu0 0
        %763 = vmatpush.bf16.msra.mxu0 0
        %764 = vmatpush.bf16.msra.mxu0 0
        %765 = vmatpush.bf16.msra.mxu0 %v755
        %766 = vmatpush.bf16.msra.mxu0 %v743
        %767 = vmatpush.bf16.msra.mxu0 %v741
        %768 = vmatmul.bf16.gmra.mxu0 %v752
        %v769 = vpop.f32.mrf.mxu0
        %v770 = vadd.f32 0.0, %v769
        %v771 = vpop.f32.mrf.mxu0
        %772 = vdwg.mxu0
        %773 = vmatpush.bf16.msra.mxu0 0
        %774 = vmatpush.bf16.msra.mxu0 0
        %775 = vmatpush.bf16.msra.mxu0 0
        %776 = vmatpush.bf16.msra.mxu0 0
        %777 = vmatpush.bf16.msra.mxu0 0
        %778 = vmatpush.bf16.msra.mxu0 %v758
        %779 = vmatpush.bf16.msra.mxu0 %v744
        %780 = vmatpush.bf16.msra.mxu0 %v742
        %781 = vmatmul.bf16.gmra.mxu0 %v752
        %v782 = vpop.f32.mrf.mxu0
        %v783 = vadd.f32 0.0, %v782
        %v784 = vpop.f32.mrf.mxu0
        %785 = vdwg.mxu0
        %v786 = vld [vmem:[%s5] sm:$0xf]
        %788 = vset.pattern.permute.xlu0 0
        %789 = vperm.xlu0 %788, %v786
        %v790 = vpop.permute.xlu0 %789
        %v792 = vmul.f32 %v770, %v790
        %v793 = vmul.f32 %v783, %v790
        %v794 = vld [vmem:[%s6] sm:$0xf]
        %796 = vset.pattern.permute.xlu0 0
        %797 = vperm.xlu0 %796, %v794
        %v798 = vpop.permute.xlu0 %797
        %v800 = vadd.f32 %v792, %v798
        %v801 = vadd.f32 %v793, %v798
        %802 = vst [vmem:[#allocation1] ss:$2 sm:$0xff] %v325
        %v803 = vld.sshfl [vmem:[#allocation1] sm:$0xff pattern:$0x75316420]
        %v804 = vld.sshfl [vmem:[#allocation1 + $0x8] sm:$0xff pattern:$0x75316420]
        %v807 = vadd.f32 %v800, %v803
        %v808 = vadd.f32 %v801, %v804
        %v809 = vmax.f32 %v807, 0.0
        %v810 = vmax.f32 %v808, 0.0
        %v813 = vrot.slane %v810, 4
        %vm814 = vcmask 1043456
        %v815 = vsel %vm814, %v809, %v813
        %817 = vst [vmem:[%s296] sm:$0xff] %v815
        %s818 = sand.u32 %s184, 1
        %s819 = scalar_lea.sflag [#allocation5], %s818
        %s820 = sand.u32 %s184, 1
        %s821 = smul.addr %s820, 8
        %s822 = scalar_lea.vmem [#allocation6], %s821
        // Predicated region
        $region53: #{tpu_custom_call.1} parent=47 // pred_check
          %p823 = pneg %p194
        $region54: #{tpu_custom_call.1} parent=47 // pred_check_branch
          %825 = sbr.rel (%p823) target = $region56
        $region55: #{tpu_custom_call.1} parent=47 // pred_region
          %827 = vsyncadd %s819, 0
          %s828 = smul.addr %s24, 2
          %s829 = smul.addr %s828, 4
          %s830 = scalar_lea.hbm %s7, %s829
          %s832 = sshll.u32 %s822, 4
          %s833 = int_to_ptr.vmem [resolvable:$true] %s832
          %s834 = sshll.u32 %s830, 4
          %s835 = int_to_ptr.hbm [resolvable:$true] %s834
          %837 = dma.vmem_to_hbm [thread:$0]  %s833, 128, %s835, %s819
        $region56: #{tpu_custom_call.1} parent=47 // pred_fallthru
          _
      $region48: #{tpu_custom_call.1} parent=5 // pred_fallthru
        _
      %p838 = scmp.le.s32.totalorder 2, %s19
      // Predicated region
      $region57: #{tpu_custom_call.1} parent=5 // pred_check
        %p839 = pneg %p838
      $region58: #{tpu_custom_call.1} parent=5 // pred_check_branch
        %841 = sbr.rel (%p839) target = $region60
      $region59: #{tpu_custom_call.1} parent=5 // pred_region
        %s842 = ssub.s32 %s19, 2
        // Predicated region
        $region61: #{tpu_custom_call.1} parent=59 // pred_check
          %p843 = pneg %p200
        $region62: #{tpu_custom_call.1} parent=59 // pred_check_branch
          %845 = sbr.rel (%p843) target = $region64
        $region63: #{tpu_custom_call.1} parent=59 // pred_region
          %s846 = sand.u32 %s185, 1
          %s847 = scalar_lea.sflag [#allocation5], %s846
          %s848 = sand.u32 %s185, 1
          %s849 = smul.addr %s848, 8
          %s850 = scalar_lea.vmem [#allocation6], %s849
          %852 = dma.done %s847, 128
        $region64: #{tpu_custom_call.1} parent=59 // pred_fallthru
          _
      $region60: #{tpu_custom_call.1} parent=5 // pred_fallthru
        _
    $region6: #{tpu_custom_call.1} parent=1 // loop_footer
      %s23 = sadd.s32 1, %s19
    $region7: #{tpu_custom_call.1} parent=1 // loop_footer_branch
      %18 = sbr.rel target = $region3
    $region8: #{tpu_custom_call.1} parent=1 // loop_exit
      _
    %853 = vsyncpa [#allocation4], 1
    %s854 = scalar_lea.sflag [#allocation4], 1
    %855 = vsyncpa %s854, 1
    %856 = vsyncpa [#allocation5], 1
    %s857 = scalar_lea.sflag [#allocation5], 1
    %858 = vsyncpa %s857, 1

</llo_original>
